<compile_context>
chip_gen: v6e
topology: v6e:2x2x1
jax: 0.10.0
libtpu: 0.0.40
codegen_flags: <defaults>
</compile_context>

<pallas_src>
import functools
import math

import jax
import jax.numpy as jnp
from jax.experimental import pallas as pl
from jax.experimental.pallas import tpu as pltpu


# ---------------------------------------------------------------------------
# Kernel: fused fc1 -> ReLU -> fc2, hidden dim tiled on the reduction axis.
# ---------------------------------------------------------------------------
def _mlp_kernel(x_ref, w1_ref, b1_ref, w2_ref, b2_ref, o_ref, acc_ref):
    k = pl.program_id(1)

    @pl.when(k == 0)
    def _init():
        acc_ref[...] = jnp.zeros_like(acc_ref)

    # Cast the streamed activations to the matmul dtype *inside* the kernel;
    # the cast is VPU work hidden under the MXU (no extra HBM pass).
    x = x_ref[...].astype(w1_ref.dtype)
    h = jnp.dot(x, w1_ref[...], preferred_element_type=jnp.float32)
    h = jnp.maximum(h + b1_ref[...], 0.0)                 # bias + ReLU in f32
    acc_ref[...] += jnp.dot(h.astype(w2_ref.dtype), w2_ref[...],
                            preferred_element_type=jnp.float32)

    @pl.when(k == pl.num_programs(1) - 1)
    def _finalize():
        o_ref[...] = (acc_ref[...] + b2_ref[...]).astype(o_ref.dtype)


# ---------------------------------------------------------------------------
# Tile selection
# ---------------------------------------------------------------------------
def _pick_row_tile(rows):
    """Multiple of 16 (bf16 sublane pack), >=128 when possible, preferring a
    row-grid extent >=4 (>=2 steps per v7x TensorCore).  Always a divisor of
    `rows`, or `rows` itself (a full-extent block is always legal)."""
    if rows % 16 != 0:
        return rows
    for cand in (512, 256, 128):
        if rows % cand == 0 and rows // cand >= 4:
            return cand
    t = min(rows, 512)
    t -= t % 16
    while t >= 16 and rows % t != 0:
        t -= 16
    return t if t >= 16 else rows


def _pick_h_tile(h_dim):
    """Hidden-dim (fc2 reduction) tile: multiple of 128 dividing h_dim."""
    if h_dim % 128 != 0:
        return h_dim
    for cand in (1024, 512, 256, 128):
        if h_dim % cand == 0 and h_dim // cand >= 2:
            return cand
    return h_dim


def _vmem_bytes(tile_r, tile_h, *, in_dim, out_d, x_bytes, w_bytes, out_bytes):
    b = 0
    b += 2 * tile_r * in_dim * x_bytes          # x tile (double-buffered)
    b += 2 * in_dim * tile_h * w_bytes          # W1 tile
    b += 2 * tile_h * out_d * w_bytes           # W2 tile
    b += 2 * 8 * tile_h * 4                     # b1 (sublane-padded)
    b += 2 * 8 * out_d * 4                      # b2
    b += 2 * tile_r * out_d * out_bytes         # output tile
    b += tile_r * out_d * 4                     # f32 accumulator scratch
    return b


_VMEM_BUDGET = 40 << 20   # conservative: leaves headroom on v7x (64 MiB VMEM)


# ---------------------------------------------------------------------------
# Wrapper
# ---------------------------------------------------------------------------
def mlp_transformer_forward(x, params, *, out_dtype=None, force_pallas=False):
    """y = fc2(relu(fc1(x))) on (..., in_dim).  Dropout(p=0) is the identity."""
    w1, b1, w2, b2 = params["w1"], params["b1"], params["w2"], params["b2"]
    in_dim, h_dim = w1.shape
    out_d = w2.shape[1]
    out_dtype = x.dtype if out_dtype is None else out_dtype

    lead = x.shape[:-1]
    rows = int(math.prod(lead)) if lead else 1

    # Tiny / unaligned problems are overhead-dominated in a custom kernel
    # (masked partial stores, ~0.35us per grid step): let XLA fuse them.
    aligned = (rows % 16 == 0 and rows >= 128
               and in_dim % 128 == 0 and out_d % 128 == 0)
    if not (aligned or force_pallas):
        h = jnp.maximum(x @ w1.astype(jnp.float32) + b1[0], 0.0)
        return (h @ w2.astype(jnp.float32) + b2[0]).astype(out_dtype)

    x2 = x.reshape(rows, in_dim)                 # NOTE: no dtype cast here

    tile_r = _pick_row_tile(rows)
    tile_h = _pick_h_tile(h_dim)

    est = functools.partial(
        _vmem_bytes, in_dim=in_dim, out_d=out_d,
        x_bytes=x2.dtype.itemsize, w_bytes=w1.dtype.itemsize,
        out_bytes=jnp.dtype(out_dtype).itemsize)

    # Shrink tiles if the buffer estimate would bust the VMEM budget
    # (re-derived for v7x's 64 MiB physical; v5e's 16 MiB scoped default is
    # handled by raising vmem_limit_bytes explicitly below).
    while est(tile_r, tile_h) > _VMEM_BUDGET and tile_h > 128 and tile_h % 256 == 0:
        tile_h //= 2
    while (est(tile_r, tile_h) > _VMEM_BUDGET and tile_r > 128
           and tile_r % 32 == 0 and rows % (tile_r // 2) == 0):
        tile_r //= 2

    grid = (rows // tile_r, h_dim // tile_h)
    vmem_limit = int(min(64 << 20, max(32 << 20, est(tile_r, tile_h) + (8 << 20))))

    out = pl.pallas_call(
        _mlp_kernel,
        out_shape=jax.ShapeDtypeStruct((rows, out_d), out_dtype),
        grid=grid,
        in_specs=[
            pl.BlockSpec((tile_r, in_dim), lambda i, k: (i, 0)),   # x rows
            pl.BlockSpec((in_dim, tile_h), lambda i, k: (0, k)),   # W1 cols
            pl.BlockSpec((1, tile_h),      lambda i, k: (0, k)),   # b1
            pl.BlockSpec((tile_h, out_d),  lambda i, k: (k, 0)),   # W2 rows
            pl.BlockSpec((1, out_d),       lambda i, k: (0, 0)),   # b2
        ],
        out_specs=pl.BlockSpec((tile_r, out_d), lambda i, k: (i, 0)),
        scratch_shapes=[pltpu.VMEM((tile_r, out_d), jnp.float32)],
        compiler_params=pltpu.CompilerParams(
            dimension_semantics=("parallel", "arbitrary"),
            vmem_limit_bytes=vmem_limit),
    )(x2, w1, b1, w2, b2)

    return out.reshape(*lead, out_d)


# ---------------------------------------------------------------------------
# Parameter construction (PyTorch-Linear-like init; weights stored bf16 once)
# ---------------------------------------------------------------------------
def init_params(key, in_dim, h_dim, out_d=None, *, matmul_dtype=jnp.bfloat16):
    out_d = in_dim if out_d is None else out_d
    k1, k2, k3, k4 = jax.random.split(key, 4)
    bound1 = 1.0 / math.sqrt(in_dim)
    bound2 = 1.0 / math.sqrt(h_dim)
    return {
        # (in, out) layout = transposed nn.Linear.weight; stored once in the
        # MXU dtype so there is no per-forward cast / extra HBM pass.
        "w1": jax.random.uniform(k1, (in_dim, h_dim), jnp.float32,
                                 -bound1, bound1).astype(matmul_dtype),
        "b1": jax.random.uniform(k2, (1, h_dim), jnp.float32, -bound1, bound1),
        "w2": jax.random.uniform(k3, (h_dim, out_d), jnp.float32,
                                 -bound2, bound2).astype(matmul_dtype),
        "b2": jax.random.uniform(k4, (1, out_d), jnp.float32, -bound2, bound2),
    }


# ---------------------------------------------------------------------------
# Pure-JAX f32 reference (same stored weights, upcast) — correctness check
# ---------------------------------------------------------------------------
def mlp_transformer_ref(x, params):
    w1 = params["w1"].astype(jnp.float32)
    w2 = params["w2"].astype(jnp.float32)
    h = jnp.maximum(x @ w1 + params["b1"][0], 0.0)
    # nn.Dropout(0.0) / eval mode is the identity, so it is omitted.
    return h @ w2 + params["b2"][0]


# ---------------------------------------------------------------------------
if __name__ == "__main__":
    # Small but lane-dense shapes consistent with MlpTransformer inside a
    # transformer block (token width in_dim, hidden h_dim = 2 * in_dim).
    # 4*128 = 512 rows after folding -> 4 "parallel" row steps x 2 hidden steps.
    B, N = 4, 128
    in_dim, h_dim = 128, 256

    key = jax.random.PRNGKey(0)
    k_x, k_p = jax.random.split(key)
    x = jax.random.normal(k_x, (B, N, in_dim), jnp.float32)
    params = init_params(k_p, in_dim, h_dim)

    out = jax.block_until_ready(mlp_transformer_forward(x, params))
    assert out.shape == (B, N, in_dim), out.shape

    ref = mlp_transformer_ref(x, params)
    max_err = float(jnp.max(jnp.abs(out - ref)))
    # bf16 MXU operands with f32 accumulation -> loosened tolerance.
    assert jnp.allclose(out, ref, rtol=2e-2, atol=2e-2), max_err

    print("KERNEL_OK")
</pallas_src>

<mosaic_0001>
module attributes {stable_mosaic.version = 11 : i64} {
  func.func @_mlp_kernel(%arg0: i32, %arg1: i32, %arg2: memref<128x128xf32, #tpu.memory_space<vmem>>, %arg3: memref<128x128xbf16, #tpu.memory_space<vmem>>, %arg4: memref<1x128xf32, #tpu.memory_space<vmem>>, %arg5: memref<128x128xbf16, #tpu.memory_space<vmem>>, %arg6: memref<1x128xf32, #tpu.memory_space<vmem>>, %arg7: memref<128x128xf32, #tpu.memory_space<vmem>>, %arg8: memref<128x128xf32, #tpu.memory_space<vmem>>) attributes {dimension_semantics = [#tpu.dimension_semantics<parallel>, #tpu.dimension_semantics<arbitrary>], iteration_bounds = array<i64: 4, 2>, scalar_prefetch = 0 : i64, scratch_operands = 1 : i64, tpu.core_type = #tpu.core_type<tc>, window_params = [{transform_indices = @transform_0, window_bounds = array<i64: 128, 128>}, {transform_indices = @transform_1, window_bounds = array<i64: 128, 128>}, {transform_indices = @transform_2, window_bounds = array<i64: 1, 128>}, {transform_indices = @transform_3, window_bounds = array<i64: 128, 128>}, {pipeline_mode = #tpu.pipeline_mode<synchronous>, transform_indices = @transform_4, window_bounds = array<i64: 1, 128>}, {transform_indices = @transform_5, window_bounds = array<i64: 128, 128>}]} {
    %c0_i32 = arith.constant 0 : i32
    %0 = arith.cmpi eq, %arg1, %c0_i32 : i32
    %1 = arith.extui %0 : i1 to i32
    %c0_i32_0 = arith.constant 0 : i32
    %2 = arith.cmpi ne, %1, %c0_i32_0 : i32
    scf.if %2 {
      %cst_15 = arith.constant 0.000000e+00 : f32
      %21 = vector.broadcast %cst_15 : f32 to vector<128x128xf32>
      %c0_16 = arith.constant 0 : index
      %c0_17 = arith.constant 0 : index
      %22 = vector.load %arg8[%c0_16, %c0_17] : memref<128x128xf32, #tpu.memory_space<vmem>>, vector<128x128xf32>
      tpu.vector_store %arg8[%c0_16, %c0_17], %21 {strides = array<i32>} : memref<128x128xf32, #tpu.memory_space<vmem>>, vector<128x128xf32>,
    } else {
    }
    %c0 = arith.constant 0 : index
    %c0_1 = arith.constant 0 : index
    %3 = vector.load %arg2[%c0, %c0_1] : memref<128x128xf32, #tpu.memory_space<vmem>>, vector<128x128xf32>
    %4 = arith.truncf %3 : vector<128x128xf32> to vector<128x128xbf16>
    %c0_2 = arith.constant 0 : index
    %c0_3 = arith.constant 0 : index
    %5 = vector.load %arg3[%c0_2, %c0_3] : memref<128x128xbf16, #tpu.memory_space<vmem>>, vector<128x128xbf16>
    %cst = arith.constant dense<0.000000e+00> : vector<128x128xf32>
    %6 = tpu.matmul %4, %5, %cst {dimension_numbers = #tpu.dot_dimension_numbers<[1], [0], [0], [1], [0, 0, 1, 1], [], []>} : vector<128x128xbf16>, vector<128x128xbf16>, vector<128x128xf32> -> vector<128x128xf32>
    %c0_4 = arith.constant 0 : index
    %c0_5 = arith.constant 0 : index
    %7 = vector.load %arg4[%c0_4, %c0_5] : memref<1x128xf32, #tpu.memory_space<vmem>>, vector<1x128xf32>
    %8 = vector.broadcast %7 : vector<1x128xf32> to vector<128x128xf32>
    %9 = arith.addf %6, %8 : vector<128x128xf32>
    %cst_6 = arith.constant 0.000000e+00 : f32
    %10 = vector.broadcast %cst_6 : f32 to vector<128x128xf32>
    %11 = arith.maximumf %9, %10 : vector<128x128xf32>
    %c0_7 = arith.constant 0 : index
    %c0_8 = arith.constant 0 : index
    %12 = vector.load %arg8[%c0_7, %c0_8] : memref<128x128xf32, #tpu.memory_space<vmem>>, vector<128x128xf32>
    %13 = arith.truncf %11 : vector<128x128xf32> to vector<128x128xbf16>
    %c0_9 = arith.constant 0 : index
    %c0_10 = arith.constant 0 : index
    %14 = vector.load %arg5[%c0_9, %c0_10] : memref<128x128xbf16, #tpu.memory_space<vmem>>, vector<128x128xbf16>
    %cst_11 = arith.constant dense<0.000000e+00> : vector<128x128xf32>
    %15 = tpu.matmul %13, %14, %cst_11 {dimension_numbers = #tpu.dot_dimension_numbers<[1], [0], [0], [1], [0, 0, 1, 1], [], []>} : vector<128x128xbf16>, vector<128x128xbf16>, vector<128x128xf32> -> vector<128x128xf32>
    %16 = arith.addf %12, %15 : vector<128x128xf32>
    %c0_12 = arith.constant 0 : index
    %c0_13 = arith.constant 0 : index
    %17 = vector.load %arg8[%c0_12, %c0_13] : memref<128x128xf32, #tpu.memory_space<vmem>>, vector<128x128xf32>
    tpu.vector_store %arg8[%c0_12, %c0_13], %16 {strides = array<i32>} : memref<128x128xf32, #tpu.memory_space<vmem>>, vector<128x128xf32>,
    %c1_i32 = arith.constant 1 : i32
    %18 = arith.cmpi eq, %arg1, %c1_i32 : i32
    %19 = arith.extui %18 : i1 to i32
    %c0_i32_14 = arith.constant 0 : i32
    %20 = arith.cmpi ne, %19, %c0_i32_14 : i32
    scf.if %20 {
      %c0_15 = arith.constant 0 : index
      %c0_16 = arith.constant 0 : index
      %21 = vector.load %arg8[%c0_15, %c0_16] : memref<128x128xf32, #tpu.memory_space<vmem>>, vector<128x128xf32>
      %c0_17 = arith.constant 0 : index
      %c0_18 = arith.constant 0 : index
      %22 = vector.load %arg6[%c0_17, %c0_18] : memref<1x128xf32, #tpu.memory_space<vmem>>, vector<1x128xf32>
      %23 = vector.broadcast %22 : vector<1x128xf32> to vector<128x128xf32>
      %24 = arith.addf %21, %23 : vector<128x128xf32>
      %c0_19 = arith.constant 0 : index
      %c0_20 = arith.constant 0 : index
      %25 = vector.load %arg7[%c0_19, %c0_20] : memref<128x128xf32, #tpu.memory_space<vmem>>, vector<128x128xf32>
      tpu.vector_store %arg7[%c0_19, %c0_20], %24 {strides = array<i32>} : memref<128x128xf32, #tpu.memory_space<vmem>>, vector<128x128xf32>,
    } else {
    }
    return
  }
  func.func @transform_0(%arg0: i32, %arg1: i32) -> (i32, i32) {
    %c0_i32 = arith.constant 0 : i32
    %c0_i32_0 = arith.constant 0 : i32
    return %arg0, %c0_i32 : i32, i32
  }
  func.func @transform_1(%arg0: i32, %arg1: i32) -> (i32, i32) {
    %c0_i32 = arith.constant 0 : i32
    %c0_i32_0 = arith.constant 0 : i32
    return %c0_i32, %arg1 : i32, i32
  }
  func.func @transform_2(%arg0: i32, %arg1: i32) -> (i32, i32) {
    %c0_i32 = arith.constant 0 : i32
    %c0_i32_0 = arith.constant 0 : i32
    return %c0_i32, %arg1 : i32, i32
  }
  func.func @transform_3(%arg0: i32, %arg1: i32) -> (i32, i32) {
    %c0_i32 = arith.constant 0 : i32
    %c0_i32_0 = arith.constant 0 : i32
    return %arg1, %c0_i32 : i32, i32
  }
  func.func @transform_4(%arg0: i32, %arg1: i32) -> (i32, i32) {
    %c0_i32 = arith.constant 0 : i32
    %c0_i32_0 = arith.constant 0 : i32
    %c0_i32_1 = arith.constant 0 : i32
    return %c0_i32, %c0_i32_0 : i32, i32
  }
  func.func @transform_5(%arg0: i32, %arg1: i32) -> (i32, i32) {
    %c0_i32 = arith.constant 0 : i32
    %c0_i32_0 = arith.constant 0 : i32
    return %arg0, %c0_i32 : i32, i32
  }
}

</mosaic_0001>

<llo_original>
// kernel: tpu_custom_call.1
$region0: #{tpu_custom_call.1}
  #allocation0 [shape = 'u32[]', space=smem, size = 0x4, offset = 0x4, fixed_abs, tag = 'smem constant byte address 0x4 - core index']
  #allocation1 [shape = 'u32[144,128]{1,0:T(1,128)}', space=vmem, size = 0x12000, scoped, tag = 'internal scratch']
  #allocation2 [shape = 'f32[128,128]{1,0:T(8,128)}', space=vmem, size = 0x10000, scoped, tag = 'scratch operand']
  %s0 = inlined_call_operand.hbm [shape: f32[512,128], index: 0, kind: input, shape index: {}]
  %s1 = inlined_call_operand.hbm [shape: bf16[128,256], index: 1, kind: input, shape index: {}]
  %s2 = inlined_call_operand.vmem [shape: f32[1,256], index: 2, kind: input, shape index: {}]
  %s3 = inlined_call_operand.hbm [shape: bf16[256,128], index: 3, kind: input, shape index: {}]
  %s4 = inlined_call_operand.vmem [shape: f32[1,128], index: 4, kind: input, shape index: {}]
  %s5 = inlined_call_operand.hbm [shape: f32[512,128], index: 5, kind: output, shape index: {}]
  %s6 = sld [smem:[#allocation0]]
  $region73: #{tpu_custom_call.1} parent=0
    _
  %s8 = ssub.s32 1, %s6
  %s9 = scalar_select 0, %s8, %s6
  $region1: #{tpu_custom_call.1} parent=0
    #allocation3 [shape = 'u8[131072]{0}', space=vmem, size = 0x20000, scoped, tag = 'input window, operand 0']
    #allocation4 [shape = 's32[2]{0}', space=sflag, size = 0x8, scoped, tag = 'scoped memory for tpu_custom_call.1']
    #allocation5 [shape = 's32[2]{0}', space=sflag, size = 0x8, scoped, tag = 'scoped memory for tpu_custom_call.1']
    #allocation6 [shape = 'u8[65536]{0}', space=vmem, size = 0x10000, scoped, tag = 'input window, operand 1']
    #allocation7 [shape = 's32[2]{0}', space=sflag, size = 0x8, scoped, tag = 'scoped memory for tpu_custom_call.1']
    #allocation8 [shape = 'u8[65536]{0}', space=vmem, size = 0x10000, scoped, tag = 'input window, operand 3']
    #allocation9 [shape = 'u8[131072]{0}', space=vmem, size = 0x20000, scoped, tag = 'output window, operand 0']
    %10 = vsyncpa [#allocation4], 0
    %s11 = scalar_lea.sflag [#allocation4], 1
    %12 = vsyncpa %s11, 0
    %13 = vsyncpa [#allocation7], 0
    %s14 = scalar_lea.sflag [#allocation7], 1
    %15 = vsyncpa %s14, 0
    %16 = vsyncpa [#allocation5], 0
    %s17 = scalar_lea.sflag [#allocation5], 1
    %18 = vsyncpa %s17, 0
    loop: start=0, step=1, limit=10
    $region2: #{tpu_custom_call.1} parent=1 // loop_pre_header
      _
    $region3: #{tpu_custom_call.1} parent=1 // loop_header
      %s20 = sphi 0, %s24
      %p21 = scmp.ge.s32.totalorder %s20, 10
      %s27 = sphi 0, %s39
      %s28 = sphi 0, %s35
      %s29 = sphi 0, %s27
      %s30 = sphi 0, %s28
      %s31 = sphi 0, %s29
      %s32 = sphi 0, %s30
      %s42 = sphi 0, %s44
      %s45 = sphi 0, %s42
      %s46 = sphi 0, %s45
      %s62 = sphi 0, %s46
      %s68 = sphi 0, %s70
      %s71 = sphi 0, %s68
      %s72 = sphi 0, %s71
      %s88 = sphi 0, %s72
      %s94 = sphi 0, %s96
      %s97 = sphi 0, %s94
      %s98 = sphi 0, %s97
      %s114 = sphi 0, %s98
      %s120 = sphi 0, %s122
      %s123 = sphi 0, %s120
      %s124 = sphi 0, %s123
      %s140 = sphi 0, %s124
      %s144 = sphi 0, %s144
      %s146 = sphi 0, %s144
      %s147 = sphi 0, %s146
      %s161 = sphi 0, %s147
      %s167 = sphi 0, %s169
      %s170 = sphi 0, %s167
      %s171 = sphi 0, %s170
      %s187 = sphi 0, %s171
    $region4: #{tpu_custom_call.1} parent=1 // loop_header_branch
      %23 = sbr.rel (%p21) target = $region8
    $region5: #{tpu_custom_call.1} parent=1 // loop_body
      %s25 = ssub.s32 %s20, 1
      %s26 = ssub.s32 %s20, 2
      %s33 = sadd.s32 1, %s28
      %p34 = scmp.ge.s32.totalorder %s33, 2
      %s35 = scalar_select %p34, 0, %s33
      %s36 = sadd.s32 1, %s27
      %s37 = scalar_select %p34, %s36, %s27
      %p38 = scmp.ge.s32.totalorder %s37, 4
      %s39 = scalar_select %p38, 0, %s37
      %s40 = ssub.s32 %s27, %s39
      %p41 = scmp.eq.s32.totalorder %s40, 0
      %s43 = sadd.s32 %s42, 1
      %s44 = scalar_select %p41, %s42, %s43
      %p47 = pneg %p41
      %p48 = scmp.eq.s32.totalorder %s20, 7
      %p49 = por %p47, %p48
      %p50 = scmp.ne.s32.totalorder %s42, %s45
      %p51 = scmp.eq.s32.totalorder %s20, 0
      %p52 = por %p50, %p51
      %p53 = scmp.ne.s32.totalorder %s42, %s45
      %p54 = scmp.eq.s32.totalorder %s25, 7
      %p55 = por %p53, %p54
      %p56 = scmp.ne.s32.totalorder %s45, %s46
      %p57 = scmp.eq.s32.totalorder %s25, 0
      %p58 = por %p56, %p57
      %p59 = scmp.ne.s32.totalorder %s45, %s46
      %p60 = scmp.eq.s32.totalorder %s26, 7
      %p61 = por %p59, %p60
      %p63 = scmp.ne.s32.totalorder %s46, %s62
      %p64 = scmp.eq.s32.totalorder %s26, 0
      %p65 = por %p63, %p64
      %s66 = ssub.s32 %s28, %s35
      %p67 = scmp.eq.s32.totalorder %s66, 0
      %s69 = sadd.s32 %s68, 1
      %s70 = scalar_select %p67, %s68, %s69
      %p73 = pneg %p67
      %p74 = scmp.eq.s32.totalorder %s20, 7
      %p75 = por %p73, %p74
      %p76 = scmp.ne.s32.totalorder %s68, %s71
      %p77 = scmp.eq.s32.totalorder %s20, 0
      %p78 = por %p76, %p77
      %p79 = scmp.ne.s32.totalorder %s68, %s71
      %p80 = scmp.eq.s32.totalorder %s25, 7
      %p81 = por %p79, %p80
      %p82 = scmp.ne.s32.totalorder %s71, %s72
      %p83 = scmp.eq.s32.totalorder %s25, 0
      %p84 = por %p82, %p83
      %p85 = scmp.ne.s32.totalorder %s71, %s72
      %p86 = scmp.eq.s32.totalorder %s26, 7
      %p87 = por %p85, %p86
      %p89 = scmp.ne.s32.totalorder %s72, %s88
      %p90 = scmp.eq.s32.totalorder %s26, 0
      %p91 = por %p89, %p90
      %s92 = ssub.s32 %s28, %s35
      %p93 = scmp.eq.s32.totalorder %s92, 0
      %s95 = sadd.s32 %s94, 1
      %s96 = scalar_select %p93, %s94, %s95
      %p99 = pneg %p93
      %p100 = scmp.eq.s32.totalorder %s20, 7
      %p101 = por %p99, %p100
      %p102 = scmp.ne.s32.totalorder %s94, %s97
      %p103 = scmp.eq.s32.totalorder %s20, 0
      %p104 = por %p102, %p103
      %p105 = scmp.ne.s32.totalorder %s94, %s97
      %p106 = scmp.eq.s32.totalorder %s25, 7
      %p107 = por %p105, %p106
      %p108 = scmp.ne.s32.totalorder %s97, %s98
      %p109 = scmp.eq.s32.totalorder %s25, 0
      %p110 = por %p108, %p109
      %p111 = scmp.ne.s32.totalorder %s97, %s98
      %p112 = scmp.eq.s32.totalorder %s26, 7
      %p113 = por %p111, %p112
      %p115 = scmp.ne.s32.totalorder %s98, %s114
      %p116 = scmp.eq.s32.totalorder %s26, 0
      %p117 = por %p115, %p116
      %s118 = ssub.s32 %s28, %s35
      %p119 = scmp.eq.s32.totalorder %s118, 0
      %s121 = sadd.s32 %s120, 1
      %s122 = scalar_select %p119, %s120, %s121
      %p125 = pneg %p119
      %p126 = scmp.eq.s32.totalorder %s20, 7
      %p127 = por %p125, %p126
      %p128 = scmp.ne.s32.totalorder %s120, %s123
      %p129 = scmp.eq.s32.totalorder %s20, 0
      %p130 = por %p128, %p129
      %p131 = scmp.ne.s32.totalorder %s120, %s123
      %p132 = scmp.eq.s32.totalorder %s25, 7
      %p133 = por %p131, %p132
      %p134 = scmp.ne.s32.totalorder %s123, %s124
      %p135 = scmp.eq.s32.totalorder %s25, 0
      %p136 = por %p134, %p135
      %p137 = scmp.ne.s32.totalorder %s123, %s124
      %p138 = scmp.eq.s32.totalorder %s26, 7
      %p139 = por %p137, %p138
      %p141 = scmp.ne.s32.totalorder %s124, %s140
      %p142 = scmp.eq.s32.totalorder %s26, 0
      %p143 = por %p141, %p142
      %s145 = sadd.s32 %s144, 1
      %p148 = scmp.eq.s32.totalorder %s20, 7
      %p149 = scmp.ne.s32.totalorder %s144, %s146
      %p150 = scmp.eq.s32.totalorder %s20, 0
      %p151 = por %p149, %p150
      %p152 = scmp.ne.s32.totalorder %s144, %s146
      %p153 = scmp.eq.s32.totalorder %s25, 7
      %p154 = por %p152, %p153
      %p155 = scmp.ne.s32.totalorder %s146, %s147
      %p156 = scmp.eq.s32.totalorder %s25, 0
      %p157 = por %p155, %p156
      %p158 = scmp.ne.s32.totalorder %s146, %s147
      %p159 = scmp.eq.s32.totalorder %s26, 7
      %p160 = por %p158, %p159
      %p162 = scmp.ne.s32.totalorder %s147, %s161
      %p163 = scmp.eq.s32.totalorder %s26, 0
      %p164 = por %p162, %p163
      %s165 = ssub.s32 %s27, %s39
      %p166 = scmp.eq.s32.totalorder %s165, 0
      %s168 = sadd.s32 %s167, 1
      %s169 = scalar_select %p166, %s167, %s168
      %p172 = pneg %p166
      %p173 = scmp.eq.s32.totalorder %s20, 7
      %p174 = por %p172, %p173
      %p175 = scmp.ne.s32.totalorder %s167, %s170
      %p176 = scmp.eq.s32.totalorder %s20, 0
      %p177 = por %p175, %p176
      %p178 = scmp.ne.s32.totalorder %s167, %s170
      %p179 = scmp.eq.s32.totalorder %s25, 7
      %p180 = por %p178, %p179
      %p181 = scmp.ne.s32.totalorder %s170, %s171
      %p182 = scmp.eq.s32.totalorder %s25, 0
      %p183 = por %p181, %p182
      %p184 = scmp.ne.s32.totalorder %s170, %s171
      %p185 = scmp.eq.s32.totalorder %s26, 7
      %p186 = por %p184, %p185
      %p188 = scmp.ne.s32.totalorder %s171, %s187
      %p189 = scmp.eq.s32.totalorder %s26, 0
      %p190 = por %p188, %p189
      %p191 = scmp.le.s32.totalorder 1, %s20
      %p192 = scmp.lt.s32.totalorder %s20, 9
      %p193 = pnand %p191, %p192
      %p194 = pneg %p193
      // Predicated region
      $region9: #{tpu_custom_call.1} parent=5 // pred_check
        _
      $region10: #{tpu_custom_call.1} parent=5 // pred_check_branch
        %196 = sbr.rel (%p193) target = $region12
      $region11: #{tpu_custom_call.1} parent=5 // pred_region
        %s197 = ssub.s32 %s20, 1
        // Predicated region
        $region13: #{tpu_custom_call.1} parent=11 // pred_check
          %p198 = pneg %p157
        $region14: #{tpu_custom_call.1} parent=11 // pred_check_branch
          %200 = sbr.rel (%p198) target = $region16
        $region15: #{tpu_custom_call.1} parent=11 // pred_region
          _
        $region16: #{tpu_custom_call.1} parent=11 // pred_fallthru
          _
      $region12: #{tpu_custom_call.1} parent=5 // pred_fallthru
        _
      %p201 = scmp.lt.s32.totalorder %s20, 8
      // Predicated region
      $region17: #{tpu_custom_call.1} parent=5 // pred_check
        %p202 = pneg %p201
      $region18: #{tpu_custom_call.1} parent=5 // pred_check_branch
        %204 = sbr.rel (%p202) target = $region20
      $region19: #{tpu_custom_call.1} parent=5 // pred_region
        // Predicated region
        $region21: #{tpu_custom_call.1} parent=19 // pred_check
          %p205 = pneg %p52
        $region22: #{tpu_custom_call.1} parent=19 // pred_check_branch
          %207 = sbr.rel (%p205) target = $region24
        $region23: #{tpu_custom_call.1} parent=19 // pred_region
          %s208 = sand.u32 %s42, 1
          %s209 = scalar_lea.sflag [#allocation4], %s208
          %s210 = sand.u32 %s42, 1
          %s211 = smul.addr %s210, 128
          %s212 = scalar_lea.vmem [#allocation3], %s211
          %s213 = smul.u32 16, %s27
          %s215 = ssub.s32 2048, 2048
          %216 = vsyncadd %s209, %s215
          %s217 = smul.addr %s213, 128
          %s218 = scalar_lea.hbm %s0, %s217
          %s219 = sshll.u32 %s212, 4
          %s220 = int_to_ptr.vmem [resolvable:$true] %s219
          %225 = dma.hbm_to_vmem [thread:$0]  %s218, 2048, %s220, %s209, 128, 128, 8
        $region24: #{tpu_custom_call.1} parent=19 // pred_fallthru
          _
        // Predicated region
        $region25: #{tpu_custom_call.1} parent=19 // pred_check
          %p226 = pneg %p78
        $region26: #{tpu_custom_call.1} parent=19 // pred_check_branch
          %228 = sbr.rel (%p226) target = $region28
        $region27: #{tpu_custom_call.1} parent=19 // pred_region
          %s229 = sand.u32 %s20, 1
          %s230 = scalar_lea.sflag [#allocation7], %s229
          %s231 = sand.u32 %s68, 1
          %s232 = smul.addr %s231, 64
          %s233 = scalar_lea.vmem [#allocation6], %s232
          %s235 = ssub.s32 1024, 1024
          %236 = vsyncadd %s230, %s235
          %s237 = smul.addr %s28, 64
          %s238 = scalar_lea.hbm %s1, %s237
          %s239 = sshll.u32 %s233, 4
          %s240 = int_to_ptr.vmem [resolvable:$true] %s239
          %245 = dma.hbm_to_vmem [thread:$0]  %s238, 1024, %s240, %s230, 128, 64, 4
        $region28: #{tpu_custom_call.1} parent=19 // pred_fallthru
          _
        // Predicated region
        $region29: #{tpu_custom_call.1} parent=19 // pred_check
          %p246 = pneg %p104
        $region30: #{tpu_custom_call.1} parent=19 // pred_check_branch
          %248 = sbr.rel (%p246) target = $region32
        $region31: #{tpu_custom_call.1} parent=19 // pred_region
          %p249 = scmp.lt.s32.totalorder %s28, 1
          %s250 = scalar_select %p249, %s28, 1
          %s251 = scalar_lea.vmem %s2, %s250
        $region32: #{tpu_custom_call.1} parent=19 // pred_fallthru
          _
        // Predicated region
        $region33: #{tpu_custom_call.1} parent=19 // pred_check
          %p252 = pneg %p130
        $region34: #{tpu_custom_call.1} parent=19 // pred_check_branch
          %254 = sbr.rel (%p252) target = $region36
        $region35: #{tpu_custom_call.1} parent=19 // pred_region
          %s255 = sand.u32 %s20, 1
          %s256 = scalar_lea.sflag [#allocation7], %s255
          %s257 = sand.u32 %s120, 1
          %s258 = smul.addr %s257, 64
          %s259 = scalar_lea.vmem [#allocation8], %s258
          %s260 = smul.u32 16, %s28
          %s262 = ssub.s32 1024, 1024
          %263 = vsyncadd %s256, %s262
          %s264 = smul.addr %s260, 64
          %s265 = scalar_lea.hbm %s3, %s264
          %s266 = sshll.u32 %s259, 4
          %s267 = int_to_ptr.vmem [resolvable:$true] %s266
          %272 = dma.hbm_to_vmem [thread:$0]  %s265, 1024, %s267, %s256, 64, 64, 4
        $region36: #{tpu_custom_call.1} parent=19 // pred_fallthru
          _
      $region20: #{tpu_custom_call.1} parent=5 // pred_fallthru
        _
      %p273 = scmp.le.s32.totalorder 1, %s20
      %p274 = scmp.lt.s32.totalorder %s20, 9
      %p275 = pnand %p273, %p274
      %p276 = pneg %p275
      // Predicated region
      $region37: #{tpu_custom_call.1} parent=5 // pred_check
        _
      $region38: #{tpu_custom_call.1} parent=5 // pred_check_branch
        %278 = sbr.rel (%p275) target = $region40
      $region39: #{tpu_custom_call.1} parent=5 // pred_region
        %s279 = ssub.s32 %s20, 1
        %s280 = sand.u32 %s45, 1
        %s281 = scalar_lea.sflag [#allocation4], %s280
        %s282 = sand.u32 %s45, 1
        %s283 = smul.addr %s282, 128
        %s284 = scalar_lea.vmem [#allocation3], %s283
        // Predicated region
        $region41: #{tpu_custom_call.1} parent=39 // pred_check
          %p285 = pneg %p58
        $region42: #{tpu_custom_call.1} parent=39 // pred_check_branch
          %287 = sbr.rel (%p285) target = $region44
        $region43: #{tpu_custom_call.1} parent=39 // pred_region
          %288 = dma.done %s281, 2048
        $region44: #{tpu_custom_call.1} parent=39 // pred_fallthru
          _
        %s289 = sand.u32 %s25, 1
        %s290 = scalar_lea.sflag [#allocation7], %s289
        %s291 = sand.u32 %s71, 1
        %s292 = smul.addr %s291, 64
        %s293 = scalar_lea.vmem [#allocation6], %s292
        // Predicated region
        $region45: #{tpu_custom_call.1} parent=39 // pred_check
          %p294 = pneg %p84
        $region46: #{tpu_custom_call.1} parent=39 // pred_check_branch
          %296 = sbr.rel (%p294) target = $region48
        $region47: #{tpu_custom_call.1} parent=39 // pred_region
          %297 = dma.done %s290, 1024
        $region48: #{tpu_custom_call.1} parent=39 // pred_fallthru
          _
        %s298 = sand.u32 %s25, 1
        %s299 = scalar_lea.sflag [#allocation7], %s298
        %s300 = sand.u32 %s123, 1
        %s301 = smul.addr %s300, 64
        %s302 = scalar_lea.vmem [#allocation8], %s301
        // Predicated region
        $region49: #{tpu_custom_call.1} parent=39 // pred_check
          %p303 = pneg %p136
        $region50: #{tpu_custom_call.1} parent=39 // pred_check_branch
          %305 = sbr.rel (%p303) target = $region52
        $region51: #{tpu_custom_call.1} parent=39 // pred_region
          %306 = dma.done %s299, 1024
        $region52: #{tpu_custom_call.1} parent=39 // pred_fallthru
          _
        %s307 = sand.u32 %s45, 1
        %s308 = scalar_lea.sflag [#allocation4], %s307
        %s309 = sand.u32 %s45, 1
        %s310 = smul.addr %s309, 128
        %s311 = scalar_lea.vmem [#allocation3], %s310
        %p312 = pneg %p58
        %p313 = pneg %p55
        %s314 = sand.u32 %s25, 1
        %s315 = scalar_lea.sflag [#allocation7], %s314
        %s316 = sand.u32 %s71, 1
        %s317 = smul.addr %s316, 64
        %s318 = scalar_lea.vmem [#allocation6], %s317
        %p319 = pneg %p84
        %p320 = pneg %p81
        %p321 = scmp.lt.s32.totalorder %s30, 1
        %s322 = scalar_select %p321, %s30, 1
        %s323 = scalar_lea.vmem %s2, %s322
        %p324 = pneg %p110
        %p325 = pneg %p107
        %s326 = sand.u32 %s25, 1
        %s327 = scalar_lea.sflag [#allocation7], %s326
        %s328 = sand.u32 %s123, 1
        %s329 = smul.addr %s328, 64
        %s330 = scalar_lea.vmem [#allocation8], %s329
        %p331 = pneg %p136
        %p332 = pneg %p133
        %p333 = pneg %p157
        %p334 = pneg %p154
        %p335 = pneg %p183
        %p336 = pneg %p180
        %s337 = sand.u32 %s170, 1
        %s338 = scalar_lea.sflag [#allocation5], %s337
        %s339 = sand.u32 %s170, 1
        %s340 = smul.addr %s339, 128
        %s341 = scalar_lea.vmem [#allocation9], %s340
        %s342 = smul.u32 16, %s29
        %p343 = scmp.lt.s32.totalorder %s30, 1
        %s344 = scalar_select %p343, %s30, 1
        %s345 = scalar_lea.vmem %s2, %s344
        %s346 = smul.u32 16, %s30
        %s347 = smul.u32 16, %s29
        %p349 = scmp.eq.s32.totalorder %s30, 0
        // Predicated region
        $region53: #{tpu_custom_call.1} parent=39 // pred_check
          %p350 = pneg %p349
        $region54: #{tpu_custom_call.1} parent=39 // pred_check_branch
          %352 = sbr.rel (%p350) target = $region56
        $region55: #{tpu_custom_call.1} parent=39 // pred_region
          %353 = vst [vmem:[#allocation2] sm:$0xff] 0.0
          %354 = vst [vmem:[#allocation2 + $0x8] sm:$0xff] 0.0
          %355 = vst [vmem:[#allocation2 + $0x10] sm:$0xff] 0.0
          %356 = vst [vmem:[#allocation2 + $0x18] sm:$0xff] 0.0
          %357 = vst [vmem:[#allocation2 + $0x20] sm:$0xff] 0.0
          %358 = vst [vmem:[#allocation2 + $0x28] sm:$0xff] 0.0
          %359 = vst [vmem:[#allocation2 + $0x30] sm:$0xff] 0.0
          %360 = vst [vmem:[#allocation2 + $0x38] sm:$0xff] 0.0
          %361 = vst [vmem:[#allocation2 + $0x40] sm:$0xff] 0.0
          %362 = vst [vmem:[#allocation2 + $0x48] sm:$0xff] 0.0
          %363 = vst [vmem:[#allocation2 + $0x50] sm:$0xff] 0.0
          %364 = vst [vmem:[#allocation2 + $0x58] sm:$0xff] 0.0
          %365 = vst [vmem:[#allocation2 + $0x60] sm:$0xff] 0.0
          %366 = vst [vmem:[#allocation2 + $0x68] sm:$0xff] 0.0
          %367 = vst [vmem:[#allocation2 + $0x70] sm:$0xff] 0.0
          %368 = vst [vmem:[#allocation2 + $0x78] sm:$0xff] 0.0
        $region56: #{tpu_custom_call.1} parent=39 // pred_fallthru
          _
        %v369 = vld [vmem:[%s284] sm:$0xff]
        %v370 = vld [vmem:[%s284 + $0x8] sm:$0xff]
        %v371 = vld [vmem:[%s284 + $0x10] sm:$0xff]
        %v372 = vld [vmem:[%s284 + $0x18] sm:$0xff]
        %v373 = vld [vmem:[%s284 + $0x20] sm:$0xff]
        %v374 = vld [vmem:[%s284 + $0x28] sm:$0xff]
        %v375 = vld [vmem:[%s284 + $0x30] sm:$0xff]
        %v376 = vld [vmem:[%s284 + $0x38] sm:$0xff]
        %v377 = vld [vmem:[%s284 + $0x40] sm:$0xff]
        %v378 = vld [vmem:[%s284 + $0x48] sm:$0xff]
        %v379 = vld [vmem:[%s284 + $0x50] sm:$0xff]
        %v380 = vld [vmem:[%s284 + $0x58] sm:$0xff]
        %v381 = vld [vmem:[%s284 + $0x60] sm:$0xff]
        %v382 = vld [vmem:[%s284 + $0x68] sm:$0xff]
        %v383 = vld [vmem:[%s284 + $0x70] sm:$0xff]
        %v384 = vld [vmem:[%s284 + $0x78] sm:$0xff]
        %v385 = vpack.c.bf16 %v370, %v369
        %v386 = vpack.c.bf16 %v372, %v371
        %v387 = vpack.c.bf16 %v374, %v373
        %v388 = vpack.c.bf16 %v376, %v375
        %v389 = vpack.c.bf16 %v378, %v377
        %v390 = vpack.c.bf16 %v380, %v379
        %v391 = vpack.c.bf16 %v382, %v381
        %v392 = vpack.c.bf16 %v384, %v383
        %v393 = vld [vmem:[%s293] sm:$0xf]
        %v394 = vld [vmem:[%s293 + $0x4] sm:$0xf]
        %v395 = vld [vmem:[%s293 + $0x8] sm:$0xf]
        %v396 = vld [vmem:[%s293 + $0xc] sm:$0xf]
        %v397 = vld [vmem:[%s293 + $0x10] sm:$0xf]
        %v398 = vld [vmem:[%s293 + $0x14] sm:$0xf]
        %v399 = vld [vmem:[%s293 + $0x18] sm:$0xf]
        %v400 = vld [vmem:[%s293 + $0x1c] sm:$0xf]
        %v401 = vld [vmem:[%s293 + $0x20] sm:$0xf]
        %v402 = vld [vmem:[%s293 + $0x24] sm:$0xf]
        %v403 = vld [vmem:[%s293 + $0x28] sm:$0xf]
        %v404 = vld [vmem:[%s293 + $0x2c] sm:$0xf]
        %v405 = vld [vmem:[%s293 + $0x30] sm:$0xf]
        %v406 = vld [vmem:[%s293 + $0x34] sm:$0xf]
        %v407 = vld [vmem:[%s293 + $0x38] sm:$0xf]
        %v408 = vld [vmem:[%s293 + $0x3c] sm:$0xf]
        %v409 = vld [vmem:[%s345] sm:$0x1]
        %v411 = vlaneseq
        %v412 = vshrl.u32 %v411, 7
        %v413 = vsub.s32 0, %v412
        %v414 = vrot.slane %v409, %v413
        %v432 = vunpack.c.l.b16 %v393
        %v433 = vunpack.c.l.b16 %v394
        %v434 = vunpack.c.l.b16 %v395
        %v435 = vunpack.c.l.b16 %v396
        %v436 = vunpack.c.l.b16 %v397
        %v437 = vunpack.c.l.b16 %v398
        %v438 = vunpack.c.l.b16 %v399
        %v439 = vunpack.c.l.b16 %v400
        %v440 = vunpack.c.l.b16 %v401
        %v441 = vunpack.c.l.b16 %v402
        %v442 = vunpack.c.l.b16 %v403
        %v443 = vunpack.c.l.b16 %v404
        %v444 = vunpack.c.l.b16 %v405
        %v445 = vunpack.c.l.b16 %v406
        %v446 = vunpack.c.l.b16 %v407
        %v447 = vunpack.c.l.b16 %v408
        %v448 = vpack.c.b16 %v433, %v432
        %v449 = vpack.c.b16 %v435, %v434
        %v450 = vpack.c.b16 %v437, %v436
        %v451 = vpack.c.b16 %v439, %v438
        %v452 = vpack.c.b16 %v441, %v440
        %v453 = vpack.c.b16 %v443, %v442
        %v454 = vpack.c.b16 %v445, %v444
        %v455 = vpack.c.b16 %v447, %v446
        %464 = vmatprep.subr.bf16.mxu0 0
        %465 = vmatpush1.bf16.msra.mxu0 %v455
        %466 = vmatprep.subr.bf16.mxu0 0
        %467 = vmatpush1.bf16.msra.mxu0 %v454
        %468 = vmatprep.subr.bf16.mxu0 0
        %469 = vmatpush1.bf16.msra.mxu0 %v453
        %470 = vmatprep.subr.bf16.mxu0 0
        %471 = vmatpush1.bf16.msra.mxu0 %v452
        %472 = vmatprep.subr.bf16.mxu0 0
        %473 = vmatpush1.bf16.msra.mxu0 %v451
        %474 = vmatprep.subr.bf16.mxu0 0
        %475 = vmatpush1.bf16.msra.mxu0 %v450
        %476 = vmatprep.subr.bf16.mxu0 0
        %477 = vmatpush1.bf16.msra.mxu0 %v449
        %478 = vmatprep.subr.bf16.mxu0 0
        %479 = vmatpush1.bf16.msra.mxu0 %v448
        %480 = vmatprep.subr.bf16.mxu0 0
        %481 = vmatpush2.bf16.msra.mxu0 0
        %482 = vmatprep.subr.bf16.mxu0 0
        %483 = vmatpush2.bf16.msra.mxu0 0
        %484 = vmatprep.subr.bf16.mxu0 0
        %485 = vmatpush2.bf16.msra.mxu0 0
        %486 = vmatprep.subr.bf16.mxu0 0
        %487 = vmatpush2.bf16.msra.mxu0 0
        %488 = vmatprep.subr.bf16.mxu0 0
        %489 = vmatpush2.bf16.msra.mxu0 0
        %490 = vmatprep.subr.bf16.mxu0 0
        %491 = vmatpush2.bf16.msra.mxu0 0
        %492 = vmatprep.subr.bf16.mxu0 0
        %493 = vmatpush2.bf16.msra.mxu0 0
        %494 = vmatprep.subr.bf16.mxu0 0
        %495 = vmatpush2.bf16.msra.mxu0 0
        %496 = vmatprep.mubr.bf16.mxu0 0
        %497 = vmatmul.mubr.bf16.gmra.mxu0 %v385
        %v498 = vpop.f32.mrf.mxu0
        %v499 = vadd.f32 %v414, %v498
        %v500 = vpop.f32.mrf.mxu0
        %v501 = vpop.f32.mrf.mxu0
        %v502 = vadd.f32 %v414, %v501
        %v503 = vpop.f32.mrf.mxu0
        %504 = vmatprep.mubr.bf16.mxu0 0
        %505 = vmatmul.mubr.bf16.gmra.mxu0 %v386
        %v506 = vpop.f32.mrf.mxu0
        %v507 = vadd.f32 %v414, %v506
        %v508 = vpop.f32.mrf.mxu0
        %v509 = vpop.f32.mrf.mxu0
        %v510 = vadd.f32 %v414, %v509
        %v511 = vpop.f32.mrf.mxu0
        %512 = vmatprep.mubr.bf16.mxu0 0
        %513 = vmatmul.mubr.bf16.gmra.mxu0 %v387
        %v514 = vpop.f32.mrf.mxu0
        %v515 = vadd.f32 %v414, %v514
        %v516 = vpop.f32.mrf.mxu0
        %v517 = vpop.f32.mrf.mxu0
        %v518 = vadd.f32 %v414, %v517
        %v519 = vpop.f32.mrf.mxu0
        %520 = vmatprep.mubr.bf16.mxu0 0
        %521 = vmatmul.mubr.bf16.gmra.mxu0 %v388
        %v522 = vpop.f32.mrf.mxu0
        %v523 = vadd.f32 %v414, %v522
        %v524 = vpop.f32.mrf.mxu0
        %v525 = vpop.f32.mrf.mxu0
        %v526 = vadd.f32 %v414, %v525
        %v527 = vpop.f32.mrf.mxu0
        %528 = vmatprep.mubr.bf16.mxu0 0
        %529 = vmatmul.mubr.bf16.gmra.mxu0 %v389
        %v530 = vpop.f32.mrf.mxu0
        %v531 = vadd.f32 %v414, %v530
        %v532 = vpop.f32.mrf.mxu0
        %v533 = vpop.f32.mrf.mxu0
        %v534 = vadd.f32 %v414, %v533
        %v535 = vpop.f32.mrf.mxu0
        %536 = vmatprep.mubr.bf16.mxu0 0
        %537 = vmatmul.mubr.bf16.gmra.mxu0 %v390
        %v538 = vpop.f32.mrf.mxu0
        %v539 = vadd.f32 %v414, %v538
        %v540 = vpop.f32.mrf.mxu0
        %v541 = vpop.f32.mrf.mxu0
        %v542 = vadd.f32 %v414, %v541
        %v543 = vpop.f32.mrf.mxu0
        %544 = vmatprep.mubr.bf16.mxu0 0
        %545 = vmatmul.mubr.bf16.gmra.mxu0 %v391
        %v546 = vpop.f32.mrf.mxu0
        %v547 = vadd.f32 %v414, %v546
        %v548 = vpop.f32.mrf.mxu0
        %v549 = vpop.f32.mrf.mxu0
        %v550 = vadd.f32 %v414, %v549
        %v551 = vpop.f32.mrf.mxu0
        %552 = vmatprep.mubr.bf16.mxu0 0
        %553 = vmatmul.mubr.bf16.gmra.mxu0 %v392
        %v554 = vpop.f32.mrf.mxu0
        %v555 = vadd.f32 %v414, %v554
        %v556 = vpop.f32.mrf.mxu0
        %v557 = vpop.f32.mrf.mxu0
        %v558 = vadd.f32 %v414, %v557
        %v559 = vpop.f32.mrf.mxu0
        %560 = vdwg.mxu0
        %v561 = vmax.f32 %v499, 0.0
        %v562 = vmax.f32 %v502, 0.0
        %v563 = vmax.f32 %v507, 0.0
        %v564 = vmax.f32 %v510, 0.0
        %v565 = vmax.f32 %v515, 0.0
        %v566 = vmax.f32 %v518, 0.0
        %v567 = vmax.f32 %v523, 0.0
        %v568 = vmax.f32 %v526, 0.0
        %v569 = vmax.f32 %v531, 0.0
        %v570 = vmax.f32 %v534, 0.0
        %v571 = vmax.f32 %v539, 0.0
        %v572 = vmax.f32 %v542, 0.0
        %v573 = vmax.f32 %v547, 0.0
        %v574 = vmax.f32 %v550, 0.0
        %v575 = vmax.f32 %v555, 0.0
        %v576 = vmax.f32 %v558, 0.0
        %v577 = vld [vmem:[#allocation2] sm:$0xff]
        %v578 = vld [vmem:[#allocation2 + $0x8] sm:$0xff]
        %v579 = vld [vmem:[#allocation2 + $0x10] sm:$0xff]
        %v580 = vld [vmem:[#allocation2 + $0x18] sm:$0xff]
        %v581 = vld [vmem:[#allocation2 + $0x20] sm:$0xff]
        %v582 = vld [vmem:[#allocation2 + $0x28] sm:$0xff]
        %v583 = vld [vmem:[#allocation2 + $0x30] sm:$0xff]
        %v584 = vld [vmem:[#allocation2 + $0x38] sm:$0xff]
        %v585 = vld [vmem:[#allocation2 + $0x40] sm:$0xff]
        %v586 = vld [vmem:[#allocation2 + $0x48] sm:$0xff]
        %v587 = vld [vmem:[#allocation2 + $0x50] sm:$0xff]
        %v588 = vld [vmem:[#allocation2 + $0x58] sm:$0xff]
        %v589 = vld [vmem:[#allocation2 + $0x60] sm:$0xff]
        %v590 = vld [vmem:[#allocation2 + $0x68] sm:$0xff]
        %v591 = vld [vmem:[#allocation2 + $0x70] sm:$0xff]
        %v592 = vld [vmem:[#allocation2 + $0x78] sm:$0xff]
        %v593 = vpack.c.bf16 %v562, %v561
        %v594 = vpack.c.bf16 %v564, %v563
        %v595 = vpack.c.bf16 %v566, %v565
        %v596 = vpack.c.bf16 %v568, %v567
        %v597 = vpack.c.bf16 %v570, %v569
        %v598 = vpack.c.bf16 %v572, %v571
        %v599 = vpack.c.bf16 %v574, %v573
        %v600 = vpack.c.bf16 %v576, %v575
        %v601 = vld [vmem:[%s302] sm:$0xf]
        %v602 = vld [vmem:[%s302 + $0x4] sm:$0xf]
        %v603 = vld [vmem:[%s302 + $0x8] sm:$0xf]
        %v604 = vld [vmem:[%s302 + $0xc] sm:$0xf]
        %v605 = vld [vmem:[%s302 + $0x10] sm:$0xf]
        %v606 = vld [vmem:[%s302 + $0x14] sm:$0xf]
        %v607 = vld [vmem:[%s302 + $0x18] sm:$0xf]
        %v608 = vld [vmem:[%s302 + $0x1c] sm:$0xf]
        %v609 = vld [vmem:[%s302 + $0x20] sm:$0xf]
        %v610 = vld [vmem:[%s302 + $0x24] sm:$0xf]
        %v611 = vld [vmem:[%s302 + $0x28] sm:$0xf]
        %v612 = vld [vmem:[%s302 + $0x2c] sm:$0xf]
        %v613 = vld [vmem:[%s302 + $0x30] sm:$0xf]
        %v614 = vld [vmem:[%s302 + $0x34] sm:$0xf]
        %v615 = vld [vmem:[%s302 + $0x38] sm:$0xf]
        %v616 = vld [vmem:[%s302 + $0x3c] sm:$0xf]
        %v633 = vunpack.c.l.b16 %v601
        %v634 = vunpack.c.l.b16 %v602
        %v635 = vunpack.c.l.b16 %v603
        %v636 = vunpack.c.l.b16 %v604
        %v637 = vunpack.c.l.b16 %v605
        %v638 = vunpack.c.l.b16 %v606
        %v639 = vunpack.c.l.b16 %v607
        %v640 = vunpack.c.l.b16 %v608
        %v641 = vunpack.c.l.b16 %v609
        %v642 = vunpack.c.l.b16 %v610
        %v643 = vunpack.c.l.b16 %v611
        %v644 = vunpack.c.l.b16 %v612
        %v645 = vunpack.c.l.b16 %v613
        %v646 = vunpack.c.l.b16 %v614
        %v647 = vunpack.c.l.b16 %v615
        %v648 = vunpack.c.l.b16 %v616
        %v649 = vpack.c.b16 %v634, %v633
        %v650 = vpack.c.b16 %v636, %v635
        %v651 = vpack.c.b16 %v638, %v637
        %v652 = vpack.c.b16 %v640, %v639
        %v653 = vpack.c.b16 %v642, %v641
        %v654 = vpack.c.b16 %v644, %v643
        %v655 = vpack.c.b16 %v646, %v645
        %v656 = vpack.c.b16 %v648, %v647
        %665 = vmatprep.subr.bf16.mxu0 0
        %666 = vmatpush1.bf16.msra.mxu0 %v656
        %667 = vmatprep.subr.bf16.mxu0 0
        %668 = vmatpush1.bf16.msra.mxu0 %v655
        %669 = vmatprep.subr.bf16.mxu0 0
        %670 = vmatpush1.bf16.msra.mxu0 %v654
        %671 = vmatprep.subr.bf16.mxu0 0
        %672 = vmatpush1.bf16.msra.mxu0 %v653
        %673 = vmatprep.subr.bf16.mxu0 0
        %674 = vmatpush1.bf16.msra.mxu0 %v652
        %675 = vmatprep.subr.bf16.mxu0 0
        %676 = vmatpush1.bf16.msra.mxu0 %v651
        %677 = vmatprep.subr.bf16.mxu0 0
        %678 = vmatpush1.bf16.msra.mxu0 %v650
        %679 = vmatprep.subr.bf16.mxu0 0
        %680 = vmatpush1.bf16.msra.mxu0 %v649
        %681 = vmatprep.subr.bf16.mxu0 0
        %682 = vmatpush2.bf16.msra.mxu0 0
        %683 = vmatprep.subr.bf16.mxu0 0
        %684 = vmatpush2.bf16.msra.mxu0 0
        %685 = vmatprep.subr.bf16.mxu0 0
        %686 = vmatpush2.bf16.msra.mxu0 0
        %687 = vmatprep.subr.bf16.mxu0 0
        %688 = vmatpush2.bf16.msra.mxu0 0
        %689 = vmatprep.subr.bf16.mxu0 0
        %690 = vmatpush2.bf16.msra.mxu0 0
        %691 = vmatprep.subr.bf16.mxu0 0
        %692 = vmatpush2.bf16.msra.mxu0 0
        %693 = vmatprep.subr.bf16.mxu0 0
        %694 = vmatpush2.bf16.msra.mxu0 0
        %695 = vmatprep.subr.bf16.mxu0 0
        %696 = vmatpush2.bf16.msra.mxu0 0
        %697 = vmatprep.mubr.bf16.mxu0 0
        %698 = vmatmul.mubr.bf16.gmra.mxu0 %v593
        %v699 = vpop.f32.mrf.mxu0
        %v700 = vadd.f32 0.0, %v699
        %v701 = vpop.f32.mrf.mxu0
        %v702 = vpop.f32.mrf.mxu0
        %v703 = vadd.f32 0.0, %v702
        %v704 = vpop.f32.mrf.mxu0
        %705 = vmatprep.mubr.bf16.mxu0 0
        %706 = vmatmul.mubr.bf16.gmra.mxu0 %v594
        %v707 = vpop.f32.mrf.mxu0
        %v708 = vadd.f32 0.0, %v707
        %v709 = vpop.f32.mrf.mxu0
        %v710 = vpop.f32.mrf.mxu0
        %v711 = vadd.f32 0.0, %v710
        %v712 = vpop.f32.mrf.mxu0
        %713 = vmatprep.mubr.bf16.mxu0 0
        %714 = vmatmul.mubr.bf16.gmra.mxu0 %v595
        %v715 = vpop.f32.mrf.mxu0
        %v716 = vadd.f32 0.0, %v715
        %v717 = vpop.f32.mrf.mxu0
        %v718 = vpop.f32.mrf.mxu0
        %v719 = vadd.f32 0.0, %v718
        %v720 = vpop.f32.mrf.mxu0
        %721 = vmatprep.mubr.bf16.mxu0 0
        %722 = vmatmul.mubr.bf16.gmra.mxu0 %v596
        %v723 = vpop.f32.mrf.mxu0
        %v724 = vadd.f32 0.0, %v723
        %v725 = vpop.f32.mrf.mxu0
        %v726 = vpop.f32.mrf.mxu0
        %v727 = vadd.f32 0.0, %v726
        %v728 = vpop.f32.mrf.mxu0
        %729 = vmatprep.mubr.bf16.mxu0 0
        %730 = vmatmul.mubr.bf16.gmra.mxu0 %v597
        %v731 = vpop.f32.mrf.mxu0
        %v732 = vadd.f32 0.0, %v731
        %v733 = vpop.f32.mrf.mxu0
        %v734 = vpop.f32.mrf.mxu0
        %v735 = vadd.f32 0.0, %v734
        %v736 = vpop.f32.mrf.mxu0
        %737 = vmatprep.mubr.bf16.mxu0 0
        %738 = vmatmul.mubr.bf16.gmra.mxu0 %v598
        %v739 = vpop.f32.mrf.mxu0
        %v740 = vadd.f32 0.0, %v739
        %v741 = vpop.f32.mrf.mxu0
        %v742 = vpop.f32.mrf.mxu0
        %v743 = vadd.f32 0.0, %v742
        %v744 = vpop.f32.mrf.mxu0
        %745 = vmatprep.mubr.bf16.mxu0 0
        %746 = vmatmul.mubr.bf16.gmra.mxu0 %v599
        %v747 = vpop.f32.mrf.mxu0
        %v748 = vadd.f32 0.0, %v747
        %v749 = vpop.f32.mrf.mxu0
        %v750 = vpop.f32.mrf.mxu0
        %v751 = vadd.f32 0.0, %v750
        %v752 = vpop.f32.mrf.mxu0
        %753 = vmatprep.mubr.bf16.mxu0 0
        %754 = vmatmul.mubr.bf16.gmra.mxu0 %v600
        %v755 = vpop.f32.mrf.mxu0
        %v756 = vadd.f32 0.0, %v755
        %v757 = vpop.f32.mrf.mxu0
        %v758 = vpop.f32.mrf.mxu0
        %v759 = vadd.f32 0.0, %v758
        %v760 = vpop.f32.mrf.mxu0
        %761 = vdwg.mxu0
        %v762 = vadd.f32 %v577, %v700
        %v763 = vadd.f32 %v578, %v703
        %v764 = vadd.f32 %v579, %v708
        %v765 = vadd.f32 %v580, %v711
        %v766 = vadd.f32 %v581, %v716
        %v767 = vadd.f32 %v582, %v719
        %v768 = vadd.f32 %v583, %v724
        %v769 = vadd.f32 %v584, %v727
        %v770 = vadd.f32 %v585, %v732
        %v771 = vadd.f32 %v586, %v735
        %v772 = vadd.f32 %v587, %v740
        %v773 = vadd.f32 %v588, %v743
        %v774 = vadd.f32 %v589, %v748
        %v775 = vadd.f32 %v590, %v751
        %v776 = vadd.f32 %v591, %v756
        %v777 = vadd.f32 %v592, %v759
        %778 = vst [vmem:[#allocation2] sm:$0xff] %v762
        %779 = vst [vmem:[#allocation2 + $0x8] sm:$0xff] %v763
        %780 = vst [vmem:[#allocation2 + $0x10] sm:$0xff] %v764
        %781 = vst [vmem:[#allocation2 + $0x18] sm:$0xff] %v765
        %782 = vst [vmem:[#allocation2 + $0x20] sm:$0xff] %v766
        %783 = vst [vmem:[#allocation2 + $0x28] sm:$0xff] %v767
        %784 = vst [vmem:[#allocation2 + $0x30] sm:$0xff] %v768
        %785 = vst [vmem:[#allocation2 + $0x38] sm:$0xff] %v769
        %786 = vst [vmem:[#allocation2 + $0x40] sm:$0xff] %v770
        %787 = vst [vmem:[#allocation2 + $0x48] sm:$0xff] %v771
        %788 = vst [vmem:[#allocation2 + $0x50] sm:$0xff] %v772
        %789 = vst [vmem:[#allocation2 + $0x58] sm:$0xff] %v773
        %790 = vst [vmem:[#allocation2 + $0x60] sm:$0xff] %v774
        %791 = vst [vmem:[#allocation2 + $0x68] sm:$0xff] %v775
        %792 = vst [vmem:[#allocation2 + $0x70] sm:$0xff] %v776
        %793 = vst [vmem:[#allocation2 + $0x78] sm:$0xff] %v777
        %p794 = scmp.eq.s32.totalorder %s30, 1
        // Predicated region
        $region57: #{tpu_custom_call.1} parent=39 // pred_check
          %p795 = pneg %p794
        $region58: #{tpu_custom_call.1} parent=39 // pred_check_branch
          %797 = sbr.rel (%p795) target = $region60
        $region59: #{tpu_custom_call.1} parent=39 // pred_region
          %v798 = vld [vmem:[#allocation2] sm:$0xff]
          %v799 = vld [vmem:[#allocation2 + $0x8] sm:$0xff]
          %v800 = vld [vmem:[#allocation2 + $0x10] sm:$0xff]
          %v801 = vld [vmem:[#allocation2 + $0x18] sm:$0xff]
          %v802 = vld [vmem:[#allocation2 + $0x20] sm:$0xff]
          %v803 = vld [vmem:[#allocation2 + $0x28] sm:$0xff]
          %v804 = vld [vmem:[#allocation2 + $0x30] sm:$0xff]
          %v805 = vld [vmem:[#allocation2 + $0x38] sm:$0xff]
          %v806 = vld [vmem:[#allocation2 + $0x40] sm:$0xff]
          %v807 = vld [vmem:[#allocation2 + $0x48] sm:$0xff]
          %v808 = vld [vmem:[#allocation2 + $0x50] sm:$0xff]
          %v809 = vld [vmem:[#allocation2 + $0x58] sm:$0xff]
          %v810 = vld [vmem:[#allocation2 + $0x60] sm:$0xff]
          %v811 = vld [vmem:[#allocation2 + $0x68] sm:$0xff]
          %v812 = vld [vmem:[#allocation2 + $0x70] sm:$0xff]
          %v813 = vld [vmem:[#allocation2 + $0x78] sm:$0xff]
          %v814 = vld [vmem:[%s4] sm:$0x1]
          %v816 = vlaneseq
          %v817 = vshrl.u32 %v816, 7
          %v818 = vsub.s32 0, %v817
          %v819 = vrot.slane %v814, %v818
          %v821 = vadd.f32 %v798, %v819
          %v822 = vadd.f32 %v799, %v819
          %v823 = vadd.f32 %v800, %v819
          %v824 = vadd.f32 %v801, %v819
          %v825 = vadd.f32 %v802, %v819
          %v826 = vadd.f32 %v803, %v819
          %v827 = vadd.f32 %v804, %v819
          %v828 = vadd.f32 %v805, %v819
          %v829 = vadd.f32 %v806, %v819
          %v830 = vadd.f32 %v807, %v819
          %v831 = vadd.f32 %v808, %v819
          %v832 = vadd.f32 %v809, %v819
          %v833 = vadd.f32 %v810, %v819
          %v834 = vadd.f32 %v811, %v819
          %v835 = vadd.f32 %v812, %v819
          %v836 = vadd.f32 %v813, %v819
          %837 = vst [vmem:[%s341] sm:$0xff] %v821
          %838 = vst [vmem:[%s341 + $0x8] sm:$0xff] %v822
          %839 = vst [vmem:[%s341 + $0x10] sm:$0xff] %v823
          %840 = vst [vmem:[%s341 + $0x18] sm:$0xff] %v824
          %841 = vst [vmem:[%s341 + $0x20] sm:$0xff] %v825
          %842 = vst [vmem:[%s341 + $0x28] sm:$0xff] %v826
          %843 = vst [vmem:[%s341 + $0x30] sm:$0xff] %v827
          %844 = vst [vmem:[%s341 + $0x38] sm:$0xff] %v828
          %845 = vst [vmem:[%s341 + $0x40] sm:$0xff] %v829
          %846 = vst [vmem:[%s341 + $0x48] sm:$0xff] %v830
          %847 = vst [vmem:[%s341 + $0x50] sm:$0xff] %v831
          %848 = vst [vmem:[%s341 + $0x58] sm:$0xff] %v832
          %849 = vst [vmem:[%s341 + $0x60] sm:$0xff] %v833
          %850 = vst [vmem:[%s341 + $0x68] sm:$0xff] %v834
          %851 = vst [vmem:[%s341 + $0x70] sm:$0xff] %v835
          %852 = vst [vmem:[%s341 + $0x78] sm:$0xff] %v836
        $region60: #{tpu_custom_call.1} parent=39 // pred_fallthru
          _
        %s853 = sand.u32 %s170, 1
        %s854 = scalar_lea.sflag [#allocation5], %s853
        %s855 = sand.u32 %s170, 1
        %s856 = smul.addr %s855, 128
        %s857 = scalar_lea.vmem [#allocation9], %s856
        // Predicated region
        $region61: #{tpu_custom_call.1} parent=39 // pred_check
          %p858 = pneg %p180
        $region62: #{tpu_custom_call.1} parent=39 // pred_check_branch
          %860 = sbr.rel (%p858) target = $region64
        $region63: #{tpu_custom_call.1} parent=39 // pred_region
          %s861 = smul.u32 16, %s29
          %s863 = ssub.s32 2048, 2048
          %864 = vsyncadd %s854, %s863
          %s865 = smul.addr %s861, 128
          %s866 = scalar_lea.hbm %s5, %s865
          %s867 = sshll.u32 %s857, 4
          %s868 = int_to_ptr.vmem [resolvable:$true] %s867
          %873 = dma.vmem_to_hbm [thread:$0]  %s868, 2048, %s866, %s854, 128, 128, 8
        $region64: #{tpu_custom_call.1} parent=39 // pred_fallthru
          _
      $region40: #{tpu_custom_call.1} parent=5 // pred_fallthru
        _
      %p874 = scmp.le.s32.totalorder 2, %s20
      // Predicated region
      $region65: #{tpu_custom_call.1} parent=5 // pred_check
        %p875 = pneg %p874
      $region66: #{tpu_custom_call.1} parent=5 // pred_check_branch
        %877 = sbr.rel (%p875) target = $region68
      $region67: #{tpu_custom_call.1} parent=5 // pred_region
        %s878 = ssub.s32 %s20, 2
        // Predicated region
        $region69: #{tpu_custom_call.1} parent=67 // pred_check
          %p879 = pneg %p186
        $region70: #{tpu_custom_call.1} parent=67 // pred_check_branch
          %881 = sbr.rel (%p879) target = $region72
        $region71: #{tpu_custom_call.1} parent=67 // pred_region
          %s882 = sand.u32 %s171, 1
          %s883 = scalar_lea.sflag [#allocation5], %s882
          %s884 = sand.u32 %s171, 1
          %s885 = smul.addr %s884, 128
          %s886 = scalar_lea.vmem [#allocation9], %s885
          %887 = dma.done %s883, 2048
        $region72: #{tpu_custom_call.1} parent=67 // pred_fallthru
          _
      $region68: #{tpu_custom_call.1} parent=5 // pred_fallthru
        _
    $region6: #{tpu_custom_call.1} parent=1 // loop_footer
      %s24 = sadd.s32 1, %s20
    $region7: #{tpu_custom_call.1} parent=1 // loop_footer_branch
      %19 = sbr.rel target = $region3
    $region8: #{tpu_custom_call.1} parent=1 // loop_exit
      _
    %888 = vsyncpa [#allocation4], 1
    %s889 = scalar_lea.sflag [#allocation4], 1
    %890 = vsyncpa %s889, 1
    %891 = vsyncpa [#allocation7], 1
    %s892 = scalar_lea.sflag [#allocation7], 1
    %893 = vsyncpa %s892, 1
    %894 = vsyncpa [#allocation5], 1
    %s895 = scalar_lea.sflag [#allocation5], 1
    %896 = vsyncpa %s895, 1

</llo_original>
